<compile_context>
chip_gen: v5e
topology: v5e:2x2
jax: 0.10.0
libtpu: 0.0.40
codegen_flags: <defaults>
</compile_context>

<pallas_src>
import jax
import jax.numpy as jnp
from jax.experimental import pallas as pl
from jax.experimental.pallas import tpu as pltpu


def _sublane_granule(dtype) -> int:
    # Native sublane tiling: (8,128) for 4-byte, (16,128) for 2-byte, (32,128) for 1-byte.
    return max(8, 32 // jnp.dtype(dtype).itemsize)


def _choose_layout(H: int, W: int):
    """Pick a copy-free (rows, lanes) spatial layout for the H*W pixels."""
    HW = H * W
    for lanes in (512, 256, 128):
        if HW % lanes == 0:
            return HW // lanes, lanes, True      # flattened view: contiguous reshape, free
    return H, W, False                           # natural (H, W): tensor left untouched


def _make_dice_stats_kernel(C, TR, LD, RD, Jh, full_tiles, needs_mask):
    """Builds the per-(split, batch) statistics kernel.

    cls_ref : (C, 1, 1)  int32 class ids (broadcast in the one-hot compare)
    pred_ref: (C, TR, LD) logits tile (spatial rows on sublanes, cols on lanes)
    tgt_ref : (TR, LD)    integer labels tile
    out_ref : (3, C)      per-(batch, split) [intersection, pred_sum, onehot_sum]
    acc_ref : (3, C, LD)  running per-lane accumulators (VMEM scratch)
    """

    def kernel(cls_ref, pred_ref, tgt_ref, out_ref, acc_ref):
        s = pl.program_id(0)
        j = pl.program_id(2)

        @pl.when(j == 0)
        def _init():
            acc_ref[...] = jnp.zeros_like(acc_ref)

        def accumulate(apply_row_mask):
            logits = pred_ref[...].astype(jnp.float32)           # (C, TR, LD)

            # Channel softmax: class axis is the leading slab axis, so max / sum
            # over it are plain cross-vreg VPU ops.
            m = jnp.max(logits, axis=0, keepdims=True)           # (1, TR, LD)
            e = jnp.exp(logits - m)                              # (C, TR, LD)
            denom = jnp.sum(e, axis=0, keepdims=True)            # (1, TR, LD)
            # EUP reciprocal (frees the VALU slot) + one Newton step (~1e-7 rel err).
            inv = pl.reciprocal(denom, approx=True)
            inv = inv * (2.0 - denom * inv)
            p = e * inv                                          # (C, TR, LD)

            tgt = tgt_ref[...].astype(jnp.int32)                 # (TR, LD)
            onehot = tgt[None, :, :] == cls_ref[...]             # (C, TR, LD), no iota

            if apply_row_mask:
                # Only tail / duplicate tiles: mask rows at/after the true extent.
                gj = s * Jh + j                                  # global spatial tile id
                row = jax.lax.broadcasted_iota(jnp.int32, (TR, 1), 0)
                valid = (gj * TR + row) < RD                     # (TR, 1)
                onehot = jnp.logical_and(onehot, valid[None, :, :])
                psum = jnp.sum(jnp.where(valid[None, :, :], p, 0.0), axis=1)  # (C, LD)
            else:
                psum = jnp.sum(p, axis=1)                        # (C, LD)

            inter = jnp.sum(jnp.where(onehot, p, 0.0), axis=1)   # (C, LD)
            ohsum = jnp.sum(jnp.where(onehot, 1.0, 0.0), axis=1)  # (C, LD)

            acc_ref[0] = acc_ref[0] + inter
            acc_ref[1] = acc_ref[1] + psum
            acc_ref[2] = acc_ref[2] + ohsum

        if needs_mask:
            gj = s * Jh + j

            @pl.when(gj < full_tiles)
            def _interior():
                accumulate(False)

            @pl.when(gj >= full_tiles)
            def _tail():
                accumulate(True)
        else:
            accumulate(False)

        @pl.when(j == Jh - 1)
        def _finalize():
            out_ref[...] = jnp.sum(acc_ref[...], axis=-1)        # (3, C)

    return kernel


def dice_loss(pred, target, *, average="micro", eps=1e-8, weight=None,
              spatial_splits=2, max_tile_rows=None):
    """pred: (N, C, H, W) logits (f32/bf16); target: (N, H, W) integer labels."""
    if average not in ("micro", "macro"):
        raise ValueError("average must be either 'micro' or 'macro'")

    N, C, H, W = pred.shape
    RD, LD, flattened = _choose_layout(H, W)

    # ---- copy-free layout (no jnp.pad of the logits, ever) -------------------
    if flattened:
        pred_l = pred.reshape(N, C, RD, LD)          # contiguous reshape: free
        tgt_l = target.reshape(N, RD, LD)
    else:
        pred_l = pred                                # natural (H, W): untouched
        tgt_l = target
    if not jnp.issubdtype(tgt_l.dtype, jnp.integer):
        tgt_l = tgt_l.astype(jnp.int32)              # int8/int16/int32 pass through as-is

    # ---- per-generation VMEM budget ------------------------------------------
    try:
        vmem_phys = int(pltpu.get_tpu_info().vmem_capacity_bytes)
    except Exception:
        vmem_phys = 64 * 1024 * 1024                 # conservative fallback
    vmem_limit = min(64 * 1024 * 1024, (vmem_phys * 3) // 4)   # ~64 MiB v5e/v6e, ~48 MiB v7x

    # ---- tile geometry --------------------------------------------------------
    granule = max(_sublane_granule(pred_l.dtype), _sublane_granule(tgt_l.dtype))
    tile_budget = min(8 * 1024 * 1024, vmem_limit // 8)        # f32-equiv pred tile budget
    rows = tile_budget // (C * LD * 4)
    if max_tile_rows is not None:                               # test/debug knob
        rows = min(rows, int(max_tile_rows))
    rows = max(granule, (rows // granule) * granule)
    TR = RD if rows >= RD else rows                             # full-dim blocks are exempt

    JT = pl.cdiv(RD, TR)                      # genuine spatial tiles
    S = max(1, min(int(spatial_splits), JT))  # leading "parallel" split (2 cores on v7x)
    Jh = pl.cdiv(JT, S)
    full_tiles = RD // TR                     # tiles with no out-of-range rows
    needs_mask = (S * Jh) > full_tiles
    clamp = (S * Jh) > JT                     # uneven split -> duplicate (masked) tiles

    def _row_block(s, j):
        g = s * Jh + j
        return jnp.minimum(g, JT - 1) if clamp else g

    class_ids = jnp.arange(C, dtype=jnp.int32).reshape(C, 1, 1)

    kernel = _make_dice_stats_kernel(C, TR, LD, RD, Jh, full_tiles, needs_mask)

    partial = pl.pallas_call(
        kernel,
        out_shape=jax.ShapeDtypeStruct((N, S, 3, C), jnp.float32),
        grid_spec=pltpu.PrefetchScalarGridSpec(
            num_scalar_prefetch=0,
            grid=(S, N, Jh),
            in_specs=[
                pl.BlockSpec((C, 1, 1), lambda s, b, j: (0, 0, 0)),
                pl.BlockSpec((None, C, TR, LD),
                             lambda s, b, j: (b, 0, _row_block(s, j), 0)),
                pl.BlockSpec((None, TR, LD),
                             lambda s, b, j: (b, _row_block(s, j), 0)),
            ],
            out_specs=pl.BlockSpec((None, None, 3, C), lambda s, b, j: (b, s, 0, 0)),
            scratch_shapes=[pltpu.VMEM((3, C, LD), jnp.float32)],
        ),
        compiler_params=pltpu.CompilerParams(
            dimension_semantics=("parallel", "parallel", "arbitrary"),
            vmem_limit_bytes=int(vmem_limit),
        ),
    )(class_ids, pred_l, tgt_l)

    # ---- tiny epilogue in JAX glue (matches the PyTorch module) --------------
    stats = jnp.sum(partial, axis=1)                 # combine the S spatial halves -> (N, 3, C)
    intersection = stats[:, 0, :]
    union = stats[:, 1, :] + stats[:, 2, :]
    dice_score = (2.0 * intersection + eps) / (union + eps)

    if average == "micro":
        return 1.0 - jnp.mean(dice_score)
    if weight is not None:
        w = jnp.asarray(weight, dtype=jnp.float32)
        return 1.0 - jnp.sum(w * jnp.mean(dice_score, axis=0)) / jnp.sum(w)
    return 1.0 - jnp.mean(dice_score)


def _reference_dice_loss(pred, target, *, average="micro", eps=1e-8, weight=None):
    # Pure-JAX mirror of the PyTorch module.
    p = jax.nn.softmax(pred.astype(jnp.float32), axis=1)
    C = pred.shape[1]
    oh = jax.nn.one_hot(target, C, dtype=jnp.float32)         # (N, H, W, C)
    oh = jnp.transpose(oh, (0, 3, 1, 2))                      # (N, C, H, W)
    inter = jnp.sum(p * oh, axis=(2, 3))
    union = jnp.sum(p, axis=(2, 3)) + jnp.sum(oh, axis=(2, 3))
    dice = (2.0 * inter + eps) / (union + eps)
    if average == "micro":
        return 1.0 - jnp.mean(dice)
    if weight is not None:
        w = jnp.asarray(weight, dtype=jnp.float32)
        return 1.0 - jnp.sum(w * jnp.mean(dice, axis=0)) / jnp.sum(w)
    return 1.0 - jnp.mean(dice)


if __name__ == "__main__":
    key = jax.random.PRNGKey(0)
    keys = jax.random.split(key, 8)

    def _check(loss, ref, name):
        assert jnp.allclose(loss, ref, atol=2e-5, rtol=2e-5), (name, float(loss), float(ref))

    # 1) Toy shape implied by the module spec: flattened lane-dense layout (HW % 256 == 0).
    N, C, H, W = 2, 4, 16, 16
    pred = jax.random.normal(keys[0], (N, C, H, W), dtype=jnp.float32)
    target = jax.random.randint(keys[1], (N, H, W), 0, C, dtype=jnp.int32)
    loss = jax.block_until_ready(dice_loss(pred, target, average="micro", eps=1e-8))
    _check(loss, _reference_dice_loss(pred, target, average="micro", eps=1e-8), "micro_f32")

    # 2) Ragged spatial extent (13x13): natural (H, W) layout, no host-side pad/copy.
    pred2 = jax.random.normal(keys[2], (2, 3, 13, 13), dtype=jnp.float32)
    target2 = jax.random.randint(keys[3], (2, 13, 13), 0, 3, dtype=jnp.int32)
    w2 = jnp.array([0.2, 0.3, 0.5], dtype=jnp.float32)
    loss2 = jax.block_until_ready(
        dice_loss(pred2, target2, average="macro", eps=1e-8, weight=w2))
    _check(loss2, _reference_dice_loss(pred2, target2, average="macro", eps=1e-8, weight=w2),
           "macro_weighted")

    # 3) bf16 logits pass straight through (upcast happens in-kernel).
    pred3 = jax.random.normal(keys[4], (1, 4, 16, 16), dtype=jnp.bfloat16)
    target3 = jax.random.randint(keys[5], (1, 16, 16), 0, 4, dtype=jnp.int32)
    loss3 = jax.block_until_ready(dice_loss(pred3, target3, average="micro", eps=1e-8))
    _check(loss3, _reference_dice_loss(pred3, target3, average="micro", eps=1e-8), "micro_bf16")

    # 4) Multi-tile spatial grid (forced small tiles): exercises the 2-way spatial
    #    split, the unmasked interior fast path, the masked ragged tail tile and
    #    the clamped duplicate tile.
    pred4 = jax.random.normal(keys[6], (1, 6, 80, 104), dtype=jnp.float32)
    target4 = jax.random.randint(keys[7], (1, 80, 104), 0, 6, dtype=jnp.int32)
    loss4 = jax.block_until_ready(
        dice_loss(pred4, target4, average="macro", eps=1e-8, max_tile_rows=32))
    _check(loss4, _reference_dice_loss(pred4, target4, average="macro", eps=1e-8),
           "macro_multitile")

    print("KERNEL_OK")
</pallas_src>

<mosaic_0001>
module attributes {stable_mosaic.version = 11 : i64} {
  func.func @kernel(%arg0: i32, %arg1: i32, %arg2: i32, %arg3: memref<4x1x1xi32, #tpu.memory_space<vmem>>, %arg4: memref<1x4x1x256xf32, #tpu.memory_space<vmem>>, %arg5: memref<1x1x256xi32, #tpu.memory_space<vmem>>, %arg6: memref<1x1x3x4xf32, #tpu.memory_space<vmem>>, %arg7: memref<3x4x256xf32, #tpu.memory_space<vmem>>) attributes {dimension_semantics = [#tpu.dimension_semantics<parallel>, #tpu.dimension_semantics<parallel>, #tpu.dimension_semantics<arbitrary>], iteration_bounds = array<i64: 1, 2, 1>, scalar_prefetch = 0 : i64, scratch_operands = 1 : i64, tpu.core_type = #tpu.core_type<tc>, window_params = [{pipeline_mode = #tpu.pipeline_mode<synchronous>, transform_indices = @transform_0, window_bounds = array<i64: 4, 1, 1>}, {transform_indices = @transform_1, window_bounds = array<i64: 1, 4, 1, 256>}, {transform_indices = @transform_2, window_bounds = array<i64: 1, 1, 256>}, {transform_indices = @transform_3, window_bounds = array<i64: 1, 1, 3, 4>}]} {
    %c0_i32 = arith.constant 0 : i32
    %0 = arith.cmpi eq, %arg2, %c0_i32 : i32
    %1 = arith.extui %0 : i1 to i32
    %c0_i32_0 = arith.constant 0 : i32
    %2 = arith.cmpi ne, %1, %c0_i32_0 : i32
    scf.if %2 {
      %cst_36 = arith.constant 0.000000e+00 : f32
      %55 = vector.broadcast %cst_36 : f32 to vector<3x4x256xf32>
      %c0_37 = arith.constant 0 : index
      %c0_38 = arith.constant 0 : index
      %c0_39 = arith.constant 0 : index
      %56 = vector.load %arg7[%c0_37, %c0_38, %c0_39] : memref<3x4x256xf32, #tpu.memory_space<vmem>>, vector<3x4x256xf32>
      tpu.vector_store %arg7[%c0_37, %c0_38, %c0_39], %55 {strides = array<i32>} : memref<3x4x256xf32, #tpu.memory_space<vmem>>, vector<3x4x256xf32>,
    } else {
    }
    %c0 = arith.constant 0 : index
    %c0_1 = arith.constant 0 : index
    %c0_2 = arith.constant 0 : index
    %c0_3 = arith.constant 0 : index
    %3 = vector.load %arg4[%c0, %c0_1, %c0_2, %c0_3] : memref<1x4x1x256xf32, #tpu.memory_space<vmem>>, vector<1x4x1x256xf32>
    %4 = vector.shape_cast %3 : vector<1x4x1x256xf32> to vector<4x1x256xf32>
    %cst = arith.constant dense<0xFF800000> : vector<1x256xf32>
    %5 = vector.multi_reduction <maximumf>, %4, %cst [0] : vector<4x1x256xf32> to vector<1x256xf32>
    %6 = vector.shape_cast %5 : vector<1x256xf32> to vector<1x1x256xf32>
    %7 = vector.broadcast %6 : vector<1x1x256xf32> to vector<4x1x256xf32>
    %8 = arith.subf %4, %7 : vector<4x1x256xf32>
    %9 = math.exp %8 : vector<4x1x256xf32>
    %cst_4 = arith.constant dense<0.000000e+00> : vector<1x256xf32>
    %10 = vector.multi_reduction <add>, %9, %cst_4 [0] : vector<4x1x256xf32> to vector<1x256xf32>
    %11 = vector.shape_cast %10 : vector<1x256xf32> to vector<1x1x256xf32>
    %12 = tpu.reciprocal %11 {approx = true} : vector<1x1x256xf32> -> vector<1x1x256xf32>
    %13 = arith.mulf %11, %12 : vector<1x1x256xf32>
    %cst_5 = arith.constant 2.000000e+00 : f32
    %14 = vector.broadcast %cst_5 : f32 to vector<1x1x256xf32>
    %15 = arith.subf %14, %13 : vector<1x1x256xf32>
    %16 = arith.mulf %12, %15 : vector<1x1x256xf32>
    %17 = vector.broadcast %16 : vector<1x1x256xf32> to vector<4x1x256xf32>
    %18 = arith.mulf %9, %17 : vector<4x1x256xf32>
    %c0_6 = arith.constant 0 : index
    %c0_7 = arith.constant 0 : index
    %c0_8 = arith.constant 0 : index
    %19 = vector.load %arg5[%c0_6, %c0_7, %c0_8] : memref<1x1x256xi32, #tpu.memory_space<vmem>>, vector<1x1x256xi32>
    %20 = vector.shape_cast %19 : vector<1x1x256xi32> to vector<1x256xi32>
    %21 = vector.shape_cast %20 : vector<1x256xi32> to vector<1x1x256xi32>
    %c0_9 = arith.constant 0 : index
    %c0_10 = arith.constant 0 : index
    %c0_11 = arith.constant 0 : index
    %22 = vector.load %arg3[%c0_9, %c0_10, %c0_11] : memref<4x1x1xi32, #tpu.memory_space<vmem>>, vector<4x1x1xi32>
    %23 = vector.broadcast %21 : vector<1x1x256xi32> to vector<4x1x256xi32>
    %24 = vector.broadcast %22 : vector<4x1x1xi32> to vector<4x1x256xi32>
    %25 = arith.cmpi eq, %23, %24 : vector<4x1x256xi32>
    %cst_12 = arith.constant dense<0.000000e+00> : vector<4x256xf32>
    %26 = vector.multi_reduction <add>, %18, %cst_12 [1] : vector<4x1x256xf32> to vector<4x256xf32>
    %cst_13 = arith.constant 0.000000e+00 : f32
    %27 = vector.broadcast %cst_13 : f32 to vector<4x1x256xf32>
    %28 = arith.select %25, %18, %27 : vector<4x1x256xi1>, vector<4x1x256xf32>
    %cst_14 = arith.constant dense<0.000000e+00> : vector<4x256xf32>
    %29 = vector.multi_reduction <add>, %28, %cst_14 [1] : vector<4x1x256xf32> to vector<4x256xf32>
    %cst_15 = arith.constant 1.000000e+00 : f32
    %cst_16 = arith.constant 0.000000e+00 : f32
    %30 = vector.broadcast %cst_15 : f32 to vector<4x1x256xf32>
    %31 = vector.broadcast %cst_16 : f32 to vector<4x1x256xf32>
    %32 = arith.select %25, %30, %31 : vector<4x1x256xi1>, vector<4x1x256xf32>
    %cst_17 = arith.constant dense<0.000000e+00> : vector<4x256xf32>
    %33 = vector.multi_reduction <add>, %32, %cst_17 [1] : vector<4x1x256xf32> to vector<4x256xf32>
    %c0_18 = arith.constant 0 : index
    %c0_19 = arith.constant 0 : index
    %c0_20 = arith.constant 0 : index
    %34 = vector.load %arg7[%c0_18, %c0_19, %c0_20] : memref<3x4x256xf32, #tpu.memory_space<vmem>>, vector<1x4x256xf32>
    %35 = vector.shape_cast %34 : vector<1x4x256xf32> to vector<4x256xf32>
    %36 = arith.addf %35, %29 : vector<4x256xf32>
    %c0_21 = arith.constant 0 : index
    %c0_22 = arith.constant 0 : index
    %c0_23 = arith.constant 0 : index
    %37 = vector.load %arg7[%c0_21, %c0_22, %c0_23] : memref<3x4x256xf32, #tpu.memory_space<vmem>>, vector<1x4x256xf32>
    %38 = vector.shape_cast %37 : vector<1x4x256xf32> to vector<4x256xf32>
    %39 = vector.shape_cast %36 : vector<4x256xf32> to vector<1x4x256xf32>
    tpu.vector_store %arg7[%c0_21, %c0_22, %c0_23], %39 {strides = array<i32>} : memref<3x4x256xf32, #tpu.memory_space<vmem>>, vector<1x4x256xf32>,
    %c1 = arith.constant 1 : index
    %c0_24 = arith.constant 0 : index
    %c0_25 = arith.constant 0 : index
    %40 = vector.load %arg7[%c1, %c0_24, %c0_25] : memref<3x4x256xf32, #tpu.memory_space<vmem>>, vector<1x4x256xf32>
    %41 = vector.shape_cast %40 : vector<1x4x256xf32> to vector<4x256xf32>
    %42 = arith.addf %41, %26 : vector<4x256xf32>
    %c1_26 = arith.constant 1 : index
    %c0_27 = arith.constant 0 : index
    %c0_28 = arith.constant 0 : index
    %43 = vector.load %arg7[%c1_26, %c0_27, %c0_28] : memref<3x4x256xf32, #tpu.memory_space<vmem>>, vector<1x4x256xf32>
    %44 = vector.shape_cast %43 : vector<1x4x256xf32> to vector<4x256xf32>
    %45 = vector.shape_cast %42 : vector<4x256xf32> to vector<1x4x256xf32>
    tpu.vector_store %arg7[%c1_26, %c0_27, %c0_28], %45 {strides = array<i32>} : memref<3x4x256xf32, #tpu.memory_space<vmem>>, vector<1x4x256xf32>,
    %c2 = arith.constant 2 : index
    %c0_29 = arith.constant 0 : index
    %c0_30 = arith.constant 0 : index
    %46 = vector.load %arg7[%c2, %c0_29, %c0_30] : memref<3x4x256xf32, #tpu.memory_space<vmem>>, vector<1x4x256xf32>
    %47 = vector.shape_cast %46 : vector<1x4x256xf32> to vector<4x256xf32>
    %48 = arith.addf %47, %33 : vector<4x256xf32>
    %c2_31 = arith.constant 2 : index
    %c0_32 = arith.constant 0 : index
    %c0_33 = arith.constant 0 : index
    %49 = vector.load %arg7[%c2_31, %c0_32, %c0_33] : memref<3x4x256xf32, #tpu.memory_space<vmem>>, vector<1x4x256xf32>
    %50 = vector.shape_cast %49 : vector<1x4x256xf32> to vector<4x256xf32>
    %51 = vector.shape_cast %48 : vector<4x256xf32> to vector<1x4x256xf32>
    tpu.vector_store %arg7[%c2_31, %c0_32, %c0_33], %51 {strides = array<i32>} : memref<3x4x256xf32, #tpu.memory_space<vmem>>, vector<1x4x256xf32>,
    %c0_i32_34 = arith.constant 0 : i32
    %52 = arith.cmpi eq, %arg2, %c0_i32_34 : i32
    %53 = arith.extui %52 : i1 to i32
    %c0_i32_35 = arith.constant 0 : i32
    %54 = arith.cmpi ne, %53, %c0_i32_35 : i32
    scf.if %54 {
      %c0_36 = arith.constant 0 : index
      %c0_37 = arith.constant 0 : index
      %c0_38 = arith.constant 0 : index
      %55 = vector.load %arg7[%c0_36, %c0_37, %c0_38] : memref<3x4x256xf32, #tpu.memory_space<vmem>>, vector<3x4x256xf32>
      %cst_39 = arith.constant dense<0.000000e+00> : vector<3x4xf32>
      %56 = vector.multi_reduction <add>, %55, %cst_39 [2] : vector<3x4x256xf32> to vector<3x4xf32>
      %c0_40 = arith.constant 0 : index
      %c0_41 = arith.constant 0 : index
      %c0_42 = arith.constant 0 : index
      %c0_43 = arith.constant 0 : index
      %57 = vector.load %arg6[%c0_40, %c0_41, %c0_42, %c0_43] : memref<1x1x3x4xf32, #tpu.memory_space<vmem>>, vector<1x1x3x4xf32>
      %58 = vector.shape_cast %57 : vector<1x1x3x4xf32> to vector<3x4xf32>
      %59 = vector.shape_cast %56 : vector<3x4xf32> to vector<1x1x3x4xf32>
      tpu.vector_store %arg6[%c0_40, %c0_41, %c0_42, %c0_43], %59 {strides = array<i32>} : memref<1x1x3x4xf32, #tpu.memory_space<vmem>>, vector<1x1x3x4xf32>,
    } else {
    }
    return
  }
  func.func @transform_0(%arg0: i32, %arg1: i32, %arg2: i32) -> (i32, i32, i32) {
    %c0_i32 = arith.constant 0 : i32
    %c0_i32_0 = arith.constant 0 : i32
    %c0_i32_1 = arith.constant 0 : i32
    %c0_i32_2 = arith.constant 0 : i32
    return %c0_i32, %c0_i32_0, %c0_i32_1 : i32, i32, i32
  }
  func.func @transform_1(%arg0: i32, %arg1: i32, %arg2: i32) -> (i32, i32, i32, i32) {
    %c1_i32 = arith.constant 1 : i32
    %0 = arith.muli %arg0, %c1_i32 : i32
    %1 = arith.addi %0, %arg2 : i32
    %c0_i32 = arith.constant 0 : i32
    %c0_i32_0 = arith.constant 0 : i32
    %c0_i32_1 = arith.constant 0 : i32
    return %arg1, %c0_i32, %1, %c0_i32_0 : i32, i32, i32, i32
  }
  func.func @transform_2(%arg0: i32, %arg1: i32, %arg2: i32) -> (i32, i32, i32) {
    %c1_i32 = arith.constant 1 : i32
    %0 = arith.muli %arg0, %c1_i32 : i32
    %1 = arith.addi %0, %arg2 : i32
    %c0_i32 = arith.constant 0 : i32
    %c0_i32_0 = arith.constant 0 : i32
    return %arg1, %1, %c0_i32 : i32, i32, i32
  }
  func.func @transform_3(%arg0: i32, %arg1: i32, %arg2: i32) -> (i32, i32, i32, i32) {
    %c0_i32 = arith.constant 0 : i32
    %c0_i32_0 = arith.constant 0 : i32
    %c0_i32_1 = arith.constant 0 : i32
    return %arg1, %arg0, %c0_i32, %c0_i32_0 : i32, i32, i32, i32
  }
}

</mosaic_0001>

<llo_original>
// kernel: tpu_custom_call.1
$region0: #{tpu_custom_call.1}
  #allocation0 [shape = 'u32[]', space=smem, size = 0x4, offset = 0x4, fixed_abs, tag = 'smem constant byte address 0x4 - core index']
  #allocation1 [shape = 'u32[72,128]{1,0:T(1,128)}', space=vmem, size = 0x9000, scoped, tag = 'internal scratch']
  #allocation2 [shape = 'f32[3,4,256]{2,1,0:T(4,128)}', space=vmem, size = 0x3000, scoped, tag = 'scratch operand']
  %s0 = inlined_call_operand.vmem [shape: s32[4,1,1], index: 0, kind: input, shape index: {}]
  %s1 = inlined_call_operand.hbm [shape: f32[2,4,1,256], index: 1, kind: input, shape index: {}]
  %s2 = inlined_call_operand.vmem [shape: s32[2,1,256], index: 2, kind: input, shape index: {}]
  %s3 = inlined_call_operand.vmem [shape: f32[2,1,3,4], index: 3, kind: output, shape index: {}]
  %s4 = sld [smem:[#allocation0]]
  $region57: #{tpu_custom_call.1} parent=0
    _
  %s6 = ssub.s32 1, %s4
  %s7 = scalar_select 0, %s6, %s4
  $region1: #{tpu_custom_call.1} parent=0
    #allocation3 [shape = 'u8[8192]{0}', space=vmem, size = 0x2000, scoped, tag = 'input window, operand 1']
    #allocation4 [shape = 's32[2]{0}', space=sflag, size = 0x8, scoped, tag = 'scoped memory for tpu_custom_call.1']
    %8 = vsyncpa [#allocation4], 0
    %s9 = scalar_lea.sflag [#allocation4], 1
    %10 = vsyncpa %s9, 0
    loop: start=0, step=1, limit=4
    $region2: #{tpu_custom_call.1} parent=1 // loop_pre_header
      _
    $region3: #{tpu_custom_call.1} parent=1 // loop_header
      %s12 = sphi 0, %s16
      %p13 = scmp.ge.s32.totalorder %s12, 4
      %s19 = sphi 0, %s38
      %s20 = sphi 0, %s34
      %s21 = sphi 0, %s30
      %s22 = sphi 0, %s19
      %s23 = sphi 0, %s20
      %s24 = sphi 0, %s21
      %s25 = sphi 0, %s22
      %s26 = sphi 0, %s23
      %s27 = sphi 0, %s24
      %s39 = sphi 0, %s39
      %s41 = sphi 0, %s39
      %s42 = sphi 0, %s41
      %s56 = sphi 0, %s42
      %s66 = sphi 0, %s68
      %s69 = sphi 0, %s66
      %s70 = sphi 0, %s69
      %s86 = sphi 0, %s70
      %s96 = sphi 0, %s98
      %s99 = sphi 0, %s96
      %s100 = sphi 0, %s99
      %s116 = sphi 0, %s100
      %s124 = sphi 0, %s126
      %s127 = sphi 0, %s124
      %s128 = sphi 0, %s127
      %s144 = sphi 0, %s128
    $region4: #{tpu_custom_call.1} parent=1 // loop_header_branch
      %15 = sbr.rel (%p13) target = $region8
    $region5: #{tpu_custom_call.1} parent=1 // loop_body
      %s17 = ssub.s32 %s12, 1
      %s18 = ssub.s32 %s12, 2
      %s28 = sadd.s32 1, %s21
      %p29 = scmp.ge.s32.totalorder %s28, 1
      %s30 = scalar_select %p29, 0, %s28
      %s31 = sadd.s32 1, %s20
      %s32 = scalar_select %p29, %s31, %s20
      %p33 = scmp.ge.s32.totalorder %s32, 2
      %s34 = scalar_select %p33, 0, %s32
      %s35 = sadd.s32 1, %s19
      %s36 = scalar_select %p33, %s35, %s19
      %p37 = scmp.ge.s32.totalorder %s36, 1
      %s38 = scalar_select %p37, 0, %s36
      %s40 = sadd.s32 %s39, 1
      %p43 = scmp.eq.s32.totalorder %s12, 1
      %p44 = scmp.ne.s32.totalorder %s39, %s41
      %p45 = scmp.eq.s32.totalorder %s12, 0
      %p46 = por %p44, %p45
      %p47 = scmp.ne.s32.totalorder %s39, %s41
      %p48 = scmp.eq.s32.totalorder %s17, 1
      %p49 = por %p47, %p48
      %p50 = scmp.ne.s32.totalorder %s41, %s42
      %p51 = scmp.eq.s32.totalorder %s17, 0
      %p52 = por %p50, %p51
      %p53 = scmp.ne.s32.totalorder %s41, %s42
      %p54 = scmp.eq.s32.totalorder %s18, 1
      %p55 = por %p53, %p54
      %p57 = scmp.ne.s32.totalorder %s42, %s56
      %p58 = scmp.eq.s32.totalorder %s18, 0
      %p59 = por %p57, %p58
      %s60 = sadd.s32 %s19, %s21
      %s61 = sadd.s32 %s38, %s30
      %s62 = ssub.s32 %s20, %s34
      %s63 = ssub.s32 %s60, %s61
      %s64 = sor.u32 %s62, %s63
      %p65 = scmp.eq.s32.totalorder %s64, 0
      %s67 = sadd.s32 %s66, 1
      %s68 = scalar_select %p65, %s66, %s67
      %p71 = pneg %p65
      %p72 = scmp.eq.s32.totalorder %s12, 1
      %p73 = por %p71, %p72
      %p74 = scmp.ne.s32.totalorder %s66, %s69
      %p75 = scmp.eq.s32.totalorder %s12, 0
      %p76 = por %p74, %p75
      %p77 = scmp.ne.s32.totalorder %s66, %s69
      %p78 = scmp.eq.s32.totalorder %s17, 1
      %p79 = por %p77, %p78
      %p80 = scmp.ne.s32.totalorder %s69, %s70
      %p81 = scmp.eq.s32.totalorder %s17, 0
      %p82 = por %p80, %p81
      %p83 = scmp.ne.s32.totalorder %s69, %s70
      %p84 = scmp.eq.s32.totalorder %s18, 1
      %p85 = por %p83, %p84
      %p87 = scmp.ne.s32.totalorder %s70, %s86
      %p88 = scmp.eq.s32.totalorder %s18, 0
      %p89 = por %p87, %p88
      %s90 = sadd.s32 %s19, %s21
      %s91 = sadd.s32 %s38, %s30
      %s92 = ssub.s32 %s20, %s34
      %s93 = ssub.s32 %s90, %s91
      %s94 = sor.u32 %s92, %s93
      %p95 = scmp.eq.s32.totalorder %s94, 0
      %s97 = sadd.s32 %s96, 1
      %s98 = scalar_select %p95, %s96, %s97
      %p101 = pneg %p95
      %p102 = scmp.eq.s32.totalorder %s12, 1
      %p103 = por %p101, %p102
      %p104 = scmp.ne.s32.totalorder %s96, %s99
      %p105 = scmp.eq.s32.totalorder %s12, 0
      %p106 = por %p104, %p105
      %p107 = scmp.ne.s32.totalorder %s96, %s99
      %p108 = scmp.eq.s32.totalorder %s17, 1
      %p109 = por %p107, %p108
      %p110 = scmp.ne.s32.totalorder %s99, %s100
      %p111 = scmp.eq.s32.totalorder %s17, 0
      %p112 = por %p110, %p111
      %p113 = scmp.ne.s32.totalorder %s99, %s100
      %p114 = scmp.eq.s32.totalorder %s18, 1
      %p115 = por %p113, %p114
      %p117 = scmp.ne.s32.totalorder %s100, %s116
      %p118 = scmp.eq.s32.totalorder %s18, 0
      %p119 = por %p117, %p118
      %s120 = ssub.s32 %s20, %s34
      %s121 = ssub.s32 %s19, %s38
      %s122 = sor.u32 %s120, %s121
      %p123 = scmp.eq.s32.totalorder %s122, 0
      %s125 = sadd.s32 %s124, 1
      %s126 = scalar_select %p123, %s124, %s125
      %p129 = pneg %p123
      %p130 = scmp.eq.s32.totalorder %s12, 1
      %p131 = por %p129, %p130
      %p132 = scmp.ne.s32.totalorder %s124, %s127
      %p133 = scmp.eq.s32.totalorder %s12, 0
      %p134 = por %p132, %p133
      %p135 = scmp.ne.s32.totalorder %s124, %s127
      %p136 = scmp.eq.s32.totalorder %s17, 1
      %p137 = por %p135, %p136
      %p138 = scmp.ne.s32.totalorder %s127, %s128
      %p139 = scmp.eq.s32.totalorder %s17, 0
      %p140 = por %p138, %p139
      %p141 = scmp.ne.s32.totalorder %s127, %s128
      %p142 = scmp.eq.s32.totalorder %s18, 1
      %p143 = por %p141, %p142
      %p145 = scmp.ne.s32.totalorder %s128, %s144
      %p146 = scmp.eq.s32.totalorder %s18, 0
      %p147 = por %p145, %p146
      %p148 = scmp.le.s32.totalorder 1, %s12
      %p149 = scmp.lt.s32.totalorder %s12, 3
      %p150 = pnand %p148, %p149
      %p151 = pneg %p150
      // Predicated region
      $region9: #{tpu_custom_call.1} parent=5 // pred_check
        _
      $region10: #{tpu_custom_call.1} parent=5 // pred_check_branch
        %153 = sbr.rel (%p150) target = $region12
      $region11: #{tpu_custom_call.1} parent=5 // pred_region
        %s154 = ssub.s32 %s12, 1
        // Predicated region
        $region13: #{tpu_custom_call.1} parent=11 // pred_check
          %p155 = pneg %p52
        $region14: #{tpu_custom_call.1} parent=11 // pred_check_branch
          %157 = sbr.rel (%p155) target = $region16
        $region15: #{tpu_custom_call.1} parent=11 // pred_region
          _
        $region16: #{tpu_custom_call.1} parent=11 // pred_fallthru
          _
      $region12: #{tpu_custom_call.1} parent=5 // pred_fallthru
        _
      %p158 = scmp.lt.s32.totalorder %s12, 2
      // Predicated region
      $region17: #{tpu_custom_call.1} parent=5 // pred_check
        %p159 = pneg %p158
      $region18: #{tpu_custom_call.1} parent=5 // pred_check_branch
        %161 = sbr.rel (%p159) target = $region20
      $region19: #{tpu_custom_call.1} parent=5 // pred_region
        // Predicated region
        $region21: #{tpu_custom_call.1} parent=19 // pred_check
          %p162 = pneg %p76
        $region22: #{tpu_custom_call.1} parent=19 // pred_check_branch
          %164 = sbr.rel (%p162) target = $region24
        $region23: #{tpu_custom_call.1} parent=19 // pred_region
          %s165 = sand.u32 %s66, 1
          %s166 = scalar_lea.sflag [#allocation4], %s165
          %s167 = sand.u32 %s66, 1
          %s168 = smul.addr %s167, 8
          %s169 = scalar_lea.vmem [#allocation3], %s168
          %s170 = sadd.s32 %s19, %s21
          %172 = vsyncadd %s166, 0
          %s173 = smul.addr %s170, 2
          %s174 = smul.addr %s20, 8
          %s175 = sadd.s32 %s173, %s174
          %s176 = scalar_lea.hbm %s1, %s175
          %s177 = sshll.u32 %s176, 4
          %s178 = int_to_ptr.hbm [resolvable:$true] %s177
          %s179 = sshll.u32 %s169, 4
          %s180 = int_to_ptr.vmem [resolvable:$true] %s179
          %185 = dma.hbm_to_vmem [thread:$0]  %s178, 128, %s180, %s166, 32, 32, 2
        $region24: #{tpu_custom_call.1} parent=19 // pred_fallthru
          _
        // Predicated region
        $region25: #{tpu_custom_call.1} parent=19 // pred_check
          %p186 = pneg %p106
        $region26: #{tpu_custom_call.1} parent=19 // pred_check_branch
          %188 = sbr.rel (%p186) target = $region28
        $region27: #{tpu_custom_call.1} parent=19 // pred_region
          %s189 = sadd.s32 %s19, %s21
          %p190 = scmp.lt.s32.totalorder %s20, 1
          %s191 = scalar_select %p190, %s20, 1
          %p192 = scmp.lt.s32.totalorder %s189, 0
          %s193 = scalar_select %p192, %s189, 0
          %s194 = smul.addr %s193, 2
          %s195 = smul.addr %s191, 2
          %s196 = sadd.s32 %s194, %s195
          %s197 = scalar_lea.vmem %s2, %s196
          %s198 = sadd.s32 %s19, %s21
        $region28: #{tpu_custom_call.1} parent=19 // pred_fallthru
          _
      $region20: #{tpu_custom_call.1} parent=5 // pred_fallthru
        _
      %p199 = scmp.le.s32.totalorder 1, %s12
      %p200 = scmp.lt.s32.totalorder %s12, 3
      %p201 = pnand %p199, %p200
      %p202 = pneg %p201
      // Predicated region
      $region29: #{tpu_custom_call.1} parent=5 // pred_check
        _
      $region30: #{tpu_custom_call.1} parent=5 // pred_check_branch
        %204 = sbr.rel (%p201) target = $region32
      $region31: #{tpu_custom_call.1} parent=5 // pred_region
        %s205 = ssub.s32 %s12, 1
        %s206 = sand.u32 %s69, 1
        %s207 = scalar_lea.sflag [#allocation4], %s206
        %s208 = sand.u32 %s69, 1
        %s209 = smul.addr %s208, 8
        %s210 = scalar_lea.vmem [#allocation3], %s209
        // Predicated region
        $region33: #{tpu_custom_call.1} parent=31 // pred_check
          %p211 = pneg %p82
        $region34: #{tpu_custom_call.1} parent=31 // pred_check_branch
          %213 = sbr.rel (%p211) target = $region36
        $region35: #{tpu_custom_call.1} parent=31 // pred_region
          %215 = dma.done %s207, 128
        $region36: #{tpu_custom_call.1} parent=31 // pred_fallthru
          _
        %p216 = pneg %p52
        %p217 = pneg %p49
        %s218 = sand.u32 %s69, 1
        %s219 = scalar_lea.sflag [#allocation4], %s218
        %s220 = sand.u32 %s69, 1
        %s221 = smul.addr %s220, 8
        %s222 = scalar_lea.vmem [#allocation3], %s221
        %p223 = pneg %p82
        %p224 = pneg %p79
        %s225 = sadd.s32 %s22, %s24
        %p226 = scmp.lt.s32.totalorder %s23, 1
        %s227 = scalar_select %p226, %s23, 1
        %p228 = scmp.lt.s32.totalorder %s225, 0
        %s229 = scalar_select %p228, %s225, 0
        %s230 = smul.addr %s229, 2
        %s231 = smul.addr %s227, 2
        %s232 = sadd.s32 %s230, %s231
        %s233 = scalar_lea.vmem %s2, %s232
        %p234 = pneg %p112
        %p235 = pneg %p109
        %p236 = pneg %p140
        %p237 = pneg %p137
        %p238 = scmp.lt.s32.totalorder %s23, 1
        %s239 = scalar_select %p238, %s23, 1
        %p240 = scmp.lt.s32.totalorder %s22, 0
        %s241 = scalar_select %p240, %s22, 0
        %s242 = sadd.s32 %s241, %s239
        %s243 = smul.addr %s242, 4
        %s244 = scalar_lea.vmem %s3, %s243
        %s245 = sadd.s32 %s22, %s24
        %s246 = sadd.s32 %s22, %s24
        %p247 = scmp.lt.s32.totalorder %s23, 1
        %s248 = scalar_select %p247, %s23, 1
        %p249 = scmp.lt.s32.totalorder %s246, 0
        %s250 = scalar_select %p249, %s246, 0
        %s251 = smul.addr %s250, 2
        %s252 = smul.addr %s248, 2
        %s253 = sadd.s32 %s251, %s252
        %s254 = scalar_lea.vmem %s2, %s253
        %s255 = sadd.s32 %s22, %s24
        %p256 = scmp.lt.s32.totalorder %s23, 1
        %s257 = scalar_select %p256, %s23, 1
        %p258 = scmp.lt.s32.totalorder %s22, 0
        %s259 = scalar_select %p258, %s22, 0
        %s260 = sadd.s32 %s259, %s257
        %s261 = smul.addr %s260, 4
        %s262 = scalar_lea.vmem %s3, %s261
        %p263 = scmp.eq.s32.totalorder %s24, 0
        // Predicated region
        $region37: #{tpu_custom_call.1} parent=31 // pred_check
          %p264 = pneg %p263
        $region38: #{tpu_custom_call.1} parent=31 // pred_check_branch
          %266 = sbr.rel (%p264) target = $region40
        $region39: #{tpu_custom_call.1} parent=31 // pred_region
          %267 = vst [vmem:[#allocation2] sm:$0xff] 0.0
          %268 = vst [vmem:[#allocation2 + $0x8] sm:$0xff] 0.0
          %269 = vst [vmem:[#allocation2 + $0x10] sm:$0xff] 0.0
        $region40: #{tpu_custom_call.1} parent=31 // pred_fallthru
          _
        %v270 = vld [vmem:[%s210] sm:$0x3]
        %v271 = vld [vmem:[%s210 + $0x2] sm:$0x3]
        %v272 = vld [vmem:[%s210 + $0x4] sm:$0x3]
        %v273 = vld [vmem:[%s210 + $0x6] sm:$0x3]
        %v274 = vlaneseq
        %vm275 = vcmp.ge.s32.totalorder %v274, 0
        %vm276 = vcmp.lt.s32.totalorder %v274, 256
        %vm277 = vmand %vm275, %vm276
        %v278 = vsel %vm277, %v270, -inf
        %v279 = vsel %vm277, %v271, -inf
        %v280 = vsel %vm277, %v272, -inf
        %v281 = vsel %vm277, %v273, -inf
        %v282 = vmax.f32 %v278, %v279
        %v283 = vmax.f32 %v280, %v281
        %v284 = vmax.f32 %v282, %v283
        %v285 = vsub.f32 %v270, %v284
        %v286 = vsub.f32 %v271, %v284
        %v287 = vsub.f32 %v272, %v284
        %v288 = vsub.f32 %v273, %v284
        %v289 = vmul.f32 %v285, 1.442695
        %v290 = vpow.pop %v289
        %v291 = vmul.f32 %v286, 1.442695
        %v292 = vpow.pop %v291
        %v293 = vmul.f32 %v287, 1.442695
        %v294 = vpow.pop %v293
        %v295 = vmul.f32 %v288, 1.442695
        %v296 = vpow.pop %v295
        %v301 = vperm.slane %v290, 0
        %v302 = vperm.slane %v290, 1
        %v303 = vperm.slane %v292, 0
        %v304 = vperm.slane %v292, 1
        %v305 = vperm.slane %v294, 0
        %v306 = vperm.slane %v294, 1
        %v307 = vperm.slane %v296, 0
        %v308 = vperm.slane %v296, 1
        %vm317 = vcmask 1040384
        %v318 = vsel %vm317, %v301, 0.0
        %v319 = vsel %vm317, %v303, 0.0
        %v320 = vadd.f32 %v318, %v319
        %v321 = vsel %vm317, %v305, 0.0
        %v322 = vadd.f32 %v320, %v321
        %v323 = vsel %vm317, %v307, 0.0
        %v324 = vadd.f32 %v322, %v323
        %v325 = vsel %vm317, %v302, 0.0
        %v326 = vsel %vm317, %v304, 0.0
        %v327 = vadd.f32 %v325, %v326
        %v328 = vsel %vm317, %v306, 0.0
        %v329 = vadd.f32 %v327, %v328
        %v330 = vsel %vm317, %v308, 0.0
        %v331 = vadd.f32 %v329, %v330
        %v332 = vrcp.pop %v324
        %v333 = vrcp.pop %v331
        %v334 = vmul.f32 %v324, %v332
        %v335 = vmul.f32 %v331, %v333
        %v336 = vsub.f32 2.0, %v334
        %v337 = vsub.f32 2.0, %v335
        %v338 = vmul.f32 %v332, %v336
        %v339 = vmul.f32 %v333, %v337
        %v342 = vrot.slane %v339, 7
        %v343 = vsel %vm317, %v338, %v342
        %v345 = vmul.f32 %v290, %v343
        %v346 = vmul.f32 %v292, %v343
        %v347 = vmul.f32 %v294, %v343
        %v348 = vmul.f32 %v296, %v343
        %v349 = vld [vmem:[%s254] sm:$0x3]
        %v350 = vld [vmem:[%s0] sm:$0x1]
        %v351 = vld [vmem:[%s0 + $0x1] sm:$0x1]
        %v352 = vld [vmem:[%s0 + $0x2] sm:$0x1]
        %v353 = vld [vmem:[%s0 + $0x3] sm:$0x1]
        %354 = vset.pattern.permute.xlu0 0
        %355 = vperm.xlu0 %354, %v350
        %v356 = vpop.permute.xlu0 %355
        %v357 = vperm.slane %v356, 0
        %358 = vset.pattern.permute.xlu0 0
        %359 = vperm.xlu0 %358, %v351
        %v360 = vpop.permute.xlu0 %359
        %v361 = vperm.slane %v360, 0
        %362 = vset.pattern.permute.xlu0 0
        %363 = vperm.xlu0 %362, %v352
        %v364 = vpop.permute.xlu0 %363
        %v365 = vperm.slane %v364, 0
        %366 = vset.pattern.permute.xlu0 0
        %367 = vperm.xlu0 %366, %v353
        %v368 = vpop.permute.xlu0 %367
        %v369 = vperm.slane %v368, 0
        %vm370 = vcmp.eq.s32.totalorder %v349, %v357
        %vm371 = vcmp.eq.s32.totalorder %v349, %v361
        %vm372 = vcmp.eq.s32.totalorder %v349, %v365
        %vm373 = vcmp.eq.s32.totalorder %v349, %v369
        %v374 = vadd.f32 %v345, 0.0
        %v375 = vadd.f32 %v346, 0.0
        %v376 = vadd.f32 %v347, 0.0
        %v377 = vadd.f32 %v348, 0.0
        %v378 = vsel %vm370, %v345, 0.0
        %v379 = vsel %vm371, %v346, 0.0
        %v380 = vsel %vm372, %v347, 0.0
        %v381 = vsel %vm373, %v348, 0.0
        %v382 = vadd.f32 %v378, 0.0
        %v383 = vadd.f32 %v379, 0.0
        %v384 = vadd.f32 %v380, 0.0
        %v385 = vadd.f32 %v381, 0.0
        %v386 = vsel %vm370, 1.0, 0.0
        %v387 = vsel %vm371, 1.0, 0.0
        %v388 = vsel %vm372, 1.0, 0.0
        %v389 = vsel %vm373, 1.0, 0.0
        %v390 = vadd.f32 %v386, 0.0
        %v391 = vadd.f32 %v387, 0.0
        %v392 = vadd.f32 %v388, 0.0
        %v393 = vadd.f32 %v389, 0.0
        %v394 = vld [vmem:[#allocation2] sm:$0xff]
        %399 = vst [vmem:[#allocation1] ss:$4 sm:$0xff] %v382
        %s400 = scalar_lea.vmem [#allocation1], 1
        %401 = vst [vmem:[%s400] ss:$4 sm:$0xff] %v383
        %s402 = scalar_lea.vmem [#allocation1], 2
        %403 = vst [vmem:[%s402] ss:$4 sm:$0xff] %v384
        %s404 = scalar_lea.vmem [#allocation1], 3
        %405 = vst [vmem:[%s404] ss:$4 sm:$0xff] %v385
        %v406 = vld [vmem:[#allocation1] sm:$0xff]
        %v408 = vadd.f32 %v394, %v406
        %409 = vst [vmem:[#allocation2] sm:$0xff] %v408
        %s410 = scalar_lea.vmem [#allocation2], 8
        %v411 = vld [vmem:[%s410] sm:$0xff]
        %416 = vst [vmem:[#allocation1] ss:$4 sm:$0xff] %v374
        %s417 = scalar_lea.vmem [#allocation1], 1
        %418 = vst [vmem:[%s417] ss:$4 sm:$0xff] %v375
        %s419 = scalar_lea.vmem [#allocation1], 2
        %420 = vst [vmem:[%s419] ss:$4 sm:$0xff] %v376
        %s421 = scalar_lea.vmem [#allocation1], 3
        %422 = vst [vmem:[%s421] ss:$4 sm:$0xff] %v377
        %v423 = vld [vmem:[#allocation1] sm:$0xff]
        %v425 = vadd.f32 %v411, %v423
        %426 = vst [vmem:[%s410] sm:$0xff] %v425
        %s427 = scalar_lea.vmem [#allocation2], 16
        %v428 = vld [vmem:[%s427] sm:$0xff]
        %433 = vst [vmem:[#allocation1] ss:$4 sm:$0xff] %v390
        %s434 = scalar_lea.vmem [#allocation1], 1
        %435 = vst [vmem:[%s434] ss:$4 sm:$0xff] %v391
        %s436 = scalar_lea.vmem [#allocation1], 2
        %437 = vst [vmem:[%s436] ss:$4 sm:$0xff] %v392
        %s438 = scalar_lea.vmem [#allocation1], 3
        %439 = vst [vmem:[%s438] ss:$4 sm:$0xff] %v393
        %v440 = vld [vmem:[#allocation1] sm:$0xff]
        %v442 = vadd.f32 %v428, %v440
        %443 = vst [vmem:[%s427] sm:$0xff] %v442
        // Predicated region
        $region41: #{tpu_custom_call.1} parent=31 // pred_check
          %p444 = pneg %p263
        $region42: #{tpu_custom_call.1} parent=31 // pred_check_branch
          %446 = sbr.rel (%p444) target = $region44
        $region43: #{tpu_custom_call.1} parent=31 // pred_region
          %v447 = vld [vmem:[#allocation2] sm:$0xff]
          %v448 = vld [vmem:[#allocation2 + $0x8] sm:$0xff]
          %v449 = vld [vmem:[#allocation2 + $0x10] sm:$0xff]
          %453 = vst [vmem:[#allocation1] ss:$2 sm:$0xff] %v447
          %v454 = vld.sshfl [vmem:[#allocation1] sm:$0xff pattern:$0x75316420]
          %v455 = vld.sshfl [vmem:[#allocation1 + $0x8] sm:$0xff pattern:$0x75316420]
          %s456 = scalar_lea.vmem [#allocation1], 16
          %457 = vst [vmem:[%s456] ss:$2 sm:$0xff] %v448
          %v458 = vld.sshfl [vmem:[#allocation1 + $0x10] sm:$0xff pattern:$0x75316420]
          %v459 = vld.sshfl [vmem:[#allocation1 + $0x18] sm:$0xff pattern:$0x75316420]
          %s460 = scalar_lea.vmem [#allocation1], 32
          %461 = vst [vmem:[%s460] ss:$2 sm:$0xff] %v449
          %v462 = vld.sshfl [vmem:[#allocation1 + $0x20] sm:$0xff pattern:$0x75316420]
          %v463 = vld.sshfl [vmem:[#allocation1 + $0x28] sm:$0xff pattern:$0x75316420]
          %vm470 = vcmask 1043456
          %v471 = vsel %vm470, %v454, 0.0
          %v472 = vsel %vm470, %v455, 0.0
          %v473 = vadd.f32 %v471, %v472
          %474 = vadd.xlane.f32.xlu0 %v473
          %v475 = vpop.xlane.xlu0 %474
          %v476 = vsel %vm470, %v458, 0.0
          %v477 = vsel %vm470, %v459, 0.0
          %v478 = vadd.f32 %v476, %v477
          %479 = vadd.xlane.f32.xlu0 %v478
          %v480 = vpop.xlane.xlu0 %479
          %v481 = vsel %vm470, %v462, 0.0
          %v482 = vsel %vm470, %v463, 0.0
          %v483 = vadd.f32 %v481, %v482
          %484 = vadd.xlane.f32.xlu0 %v483
          %v485 = vpop.xlane.xlu0 %484
          %v489 = vlaneseq
          %v490 = vand.u32 %v489, 127
          %v491 = vperm.slane %v475, %v490
          %v492 = vperm.slane %v480, %v490
          %v493 = vperm.slane %v485, %v490
          %vm494 = vcmask 1041409
          %v495 = vsel %vm494, %v492, %v491
          %vm496 = vcmask 1042434
          %v497 = vsel %vm496, %v493, %v495
          %vm499 = vcmask 26624
          %500 = vst.msk [vmem:[%s262] sm:$0x7] %vm499, %v497
        $region44: #{tpu_custom_call.1} parent=31 // pred_fallthru
          _
        %p501 = scmp.lt.s32.totalorder %s23, 1
        %s502 = scalar_select %p501, %s23, 1
        %p503 = scmp.lt.s32.totalorder %s22, 0
        %s504 = scalar_select %p503, %s22, 0
        %s505 = sadd.s32 %s504, %s502
        %s506 = smul.addr %s505, 4
        %s507 = scalar_lea.vmem %s3, %s506
        // Predicated region
        $region45: #{tpu_custom_call.1} parent=31 // pred_check
          %p508 = pneg %p137
        $region46: #{tpu_custom_call.1} parent=31 // pred_check_branch
          %510 = sbr.rel (%p508) target = $region48
        $region47: #{tpu_custom_call.1} parent=31 // pred_region
          _
        $region48: #{tpu_custom_call.1} parent=31 // pred_fallthru
          _
      $region32: #{tpu_custom_call.1} parent=5 // pred_fallthru
        _
      %p511 = scmp.le.s32.totalorder 2, %s12
      // Predicated region
      $region49: #{tpu_custom_call.1} parent=5 // pred_check
        %p512 = pneg %p511
      $region50: #{tpu_custom_call.1} parent=5 // pred_check_branch
        %514 = sbr.rel (%p512) target = $region52
      $region51: #{tpu_custom_call.1} parent=5 // pred_region
        %s515 = ssub.s32 %s12, 2
        // Predicated region
        $region53: #{tpu_custom_call.1} parent=51 // pred_check
          %p516 = pneg %p143
        $region54: #{tpu_custom_call.1} parent=51 // pred_check_branch
          %518 = sbr.rel (%p516) target = $region56
        $region55: #{tpu_custom_call.1} parent=51 // pred_region
          %p519 = scmp.lt.s32.totalorder %s26, 1
          %s520 = scalar_select %p519, %s26, 1
          %p521 = scmp.lt.s32.totalorder %s25, 0
          %s522 = scalar_select %p521, %s25, 0
          %s523 = sadd.s32 %s522, %s520
          %s524 = smul.addr %s523, 4
          %s525 = scalar_lea.vmem %s3, %s524
        $region56: #{tpu_custom_call.1} parent=51 // pred_fallthru
          _
      $region52: #{tpu_custom_call.1} parent=5 // pred_fallthru
        _
    $region6: #{tpu_custom_call.1} parent=1 // loop_footer
      %s16 = sadd.s32 1, %s12
    $region7: #{tpu_custom_call.1} parent=1 // loop_footer_branch
      %11 = sbr.rel target = $region3
    $region8: #{tpu_custom_call.1} parent=1 // loop_exit
      _
    %526 = vsyncpa [#allocation4], 1
    %s527 = scalar_lea.sflag [#allocation4], 1
    %528 = vsyncpa %s527, 1

</llo_original>
